<compile_context>
chip_gen: v6e
topology: v6e:2x2x1
jax: 0.10.0
libtpu: 0.0.40
codegen_flags: <defaults>
</compile_context>

<pallas_src>
import jax
import jax.numpy as jnp
from jax.experimental import pallas as pl
from jax.experimental.pallas import tpu as pltpu

_LANES = 128
_TARGET_BLOCK_BYTES = 2 * 1024 * 1024   # ~2 MiB of input bytes per grid step
_MAX_TILE_ROWS = 8192                   # hard cap on rows per block
_N_SPLITS = 2                           # one split per v7x TensorCore


def _entropy_loss_kernel(x_ref, out_ref):
    """Accumulate sum(-sigmoid(x)*log(sigmoid(x))) over this split's tiles.

    x_ref:   (tile_m, 128) block of the flattened input, native dtype.
    out_ref: (8, 128) f32 resident accumulator block for this split; per-lane
             partial sums live in row 0 (rows 1..7 stay zero).
    """
    i = pl.program_id(1)                      # tile index within this split

    @pl.when(i == 0)
    def _():
        out_ref[...] = jnp.zeros_like(out_ref)

    x = x_ref[...].astype(jnp.float32)        # lane-dense (tile_m, 128)
    # -p*log(p), p = sigmoid(x): t = softplus(-x) = max(-x,0)+log(1+exp(-|x|)),
    # term = t * exp(-t). Finite (0) where exp(-x) would overflow; no divide.
    e = jnp.exp(-jnp.abs(x))
    t = jnp.maximum(-x, 0.0) + jnp.log(1.0 + e)
    term = t * jnp.exp(-t)
    # Per-lane partial sums only (vreg adds + one sublane reduce per step);
    # the single cross-lane reduction happens once, outside the grid loop.
    out_ref[0:1, :] += jnp.sum(term, axis=0, keepdims=True)


def _entropy_terms(x):
    """Stable elementwise -sigmoid(x)*log(sigmoid(x)) in f32 (plain JAX)."""
    x = x.astype(jnp.float32)
    t = jnp.maximum(-x, 0.0) + jnp.log1p(jnp.exp(-jnp.abs(x)))
    return t * jnp.exp(-t)


def entropy_loss(inputs, target=None, sigmoid_normalization=True):
    """Forward of EntropyLoss: sum(-p*log(p)) with p = sigmoid(inputs).

    `target` (and the module's epsilon / weight / ignore_index) are unused by
    the PyTorch forward and therefore ignored here as well.
    """
    del target
    if not sigmoid_normalization:
        # TODO(synk): softmax(dim=1) normalization path not implemented; the
        # module default (sigmoid) is what this kernel specializes.
        raise NotImplementedError("softmax normalization not implemented")

    x = jnp.ravel(inputs)                   # native dtype: no HBM upcast copy
    total = x.size
    rows = total // _LANES                  # number of complete 128-lane rows

    itemsize = x.dtype.itemsize
    row_align = {4: 8, 2: 16, 1: 32}.get(itemsize, 8)   # min sublane tile
    max_rows = min(_MAX_TILE_ROWS, _TARGET_BLOCK_BYTES // (_LANES * itemsize))
    tile_m = min(max_rows, (rows // row_align) * row_align)

    loss = jnp.zeros((), jnp.float32)
    main_rows = 0
    if tile_m > 0:
        n_tiles = rows // tile_m
        n_splits = _N_SPLITS if n_tiles >= _N_SPLITS else 1
        n_tiles = (n_tiles // n_splits) * n_splits        # whole tiles per split
        n_per_split = n_tiles // n_splits
        main_rows = n_tiles * tile_m

        if total == rows * _LANES:
            x2d = x.reshape(rows, _LANES)                 # free reshape, no copy
        else:
            # TODO(synk): one prefix-slice copy when total % 128 != 0; avoiding
            # it would need a manual (pl.ANY + DMA) tail path.
            x2d = x[: main_rows * _LANES].reshape(main_rows, _LANES)

        partials = pl.pallas_call(
            _entropy_loss_kernel,
            out_shape=jax.ShapeDtypeStruct((8 * n_splits, _LANES), jnp.float32),
            grid=(n_splits, n_per_split),
            in_specs=[pl.BlockSpec(
                (tile_m, _LANES),
                lambda c, i, n=n_per_split: (c * n + i, 0))],
            out_specs=pl.BlockSpec((8, _LANES), lambda c, i: (c, 0)),
            compiler_params=pltpu.CompilerParams(
                dimension_semantics=("parallel", "arbitrary"),
                vmem_limit_bytes=32 * 1024 * 1024),
        )(x2d)
        loss = jnp.sum(partials)            # single cross-lane reduction

    # Remainder not covered by whole tiles (plus the sub-128-element tail):
    # one small fused JAX pass added to the kernel's partial sum.
    if main_rows * _LANES < total:
        loss = loss + jnp.sum(_entropy_terms(x[main_rows * _LANES:]))
    return loss


def entropy_loss_reference(inputs):
    """Pure-JAX mirror of the PyTorch module (sigmoid path)."""
    p = jax.nn.sigmoid(inputs.astype(jnp.float32))
    return jnp.sum(-p * jnp.log(p))


if __name__ == "__main__":
    key = jax.random.PRNGKey(0)
    k1, k2, k3, k4 = jax.random.split(key, 4)

    # Shapes implied by the module: NCHW logits + integer target (unused).
    N, C, H, W = 2, 4, 16, 16
    inputs = jax.random.normal(k1, (N, C, H, W), dtype=jnp.float32)
    targets = jax.random.randint(k2, (N, H, W), 0, C, dtype=jnp.int32)

    loss = jax.block_until_ready(entropy_loss(inputs, targets))
    ref = entropy_loss_reference(inputs)
    assert jnp.allclose(loss, ref, rtol=1e-4, atol=1e-4), (loss, ref)

    # bf16, non-tile-aligned size: native-dtype streaming + JAX remainder path.
    x_b = jax.random.normal(k3, (2, 3, 97, 65), dtype=jnp.float32).astype(jnp.bfloat16)
    loss_b = jax.block_until_ready(entropy_loss(x_b))
    ref_b = entropy_loss_reference(x_b)
    assert jnp.allclose(loss_b, ref_b, rtol=1e-4, atol=1e-2), (loss_b, ref_b)

    # Larger bf16 input: exercises the two-way "parallel" split (v7x megacore).
    x_c = jax.random.normal(k4, (4, 8, 256, 256), dtype=jnp.bfloat16)
    loss_c = jax.block_until_ready(entropy_loss(x_c))
    ref_c = entropy_loss_reference(x_c)
    assert jnp.allclose(loss_c, ref_c, rtol=1e-4, atol=1e-2), (loss_c, ref_c)

    print("KERNEL_OK")
</pallas_src>

<mosaic_0001>
module attributes {stable_mosaic.version = 11 : i64} {
  func.func @_entropy_loss_kernel(%arg0: i32, %arg1: i32, %arg2: memref<16x128xf32, #tpu.memory_space<vmem>>, %arg3: memref<8x128xf32, #tpu.memory_space<vmem>>) attributes {dimension_semantics = [#tpu.dimension_semantics<parallel>, #tpu.dimension_semantics<arbitrary>], iteration_bounds = array<i64: 1, 1>, scalar_prefetch = 0 : i64, scratch_operands = 0 : i64, tpu.core_type = #tpu.core_type<tc>, window_params = [{transform_indices = @transform_0, window_bounds = array<i64: 16, 128>}, {transform_indices = @transform_1, window_bounds = array<i64: 8, 128>}]} {
    %c0_i32 = arith.constant 0 : i32
    %0 = arith.cmpi eq, %arg1, %c0_i32 : i32
    %1 = arith.extui %0 : i1 to i32
    %c0_i32_0 = arith.constant 0 : i32
    %2 = arith.cmpi ne, %1, %c0_i32_0 : i32
    scf.if %2 {
      %cst_11 = arith.constant 0.000000e+00 : f32
      %25 = vector.broadcast %cst_11 : f32 to vector<8x128xf32>
      %c0_12 = arith.constant 0 : index
      %c0_13 = arith.constant 0 : index
      %26 = vector.load %arg3[%c0_12, %c0_13] : memref<8x128xf32, #tpu.memory_space<vmem>>, vector<8x128xf32>
      tpu.vector_store %arg3[%c0_12, %c0_13], %25 {strides = array<i32>} : memref<8x128xf32, #tpu.memory_space<vmem>>, vector<8x128xf32>,
    } else {
    }
    %c0 = arith.constant 0 : index
    %c0_1 = arith.constant 0 : index
    %3 = vector.load %arg2[%c0, %c0_1] : memref<16x128xf32, #tpu.memory_space<vmem>>, vector<16x128xf32>
    %4 = math.absf %3 : vector<16x128xf32>
    %cst = arith.constant 0.000000e+00 : f32
    %5 = vector.broadcast %cst : f32 to vector<16x128xf32>
    %6 = arith.subf %5, %4 : vector<16x128xf32>
    %7 = math.exp %6 : vector<16x128xf32>
    %cst_2 = arith.constant 0.000000e+00 : f32
    %8 = vector.broadcast %cst_2 : f32 to vector<16x128xf32>
    %9 = arith.subf %8, %3 : vector<16x128xf32>
    %cst_3 = arith.constant 0.000000e+00 : f32
    %10 = vector.broadcast %cst_3 : f32 to vector<16x128xf32>
    %11 = arith.maximumf %9, %10 : vector<16x128xf32>
    %cst_4 = arith.constant 1.000000e+00 : f32
    %12 = vector.broadcast %cst_4 : f32 to vector<16x128xf32>
    %13 = arith.addf %12, %7 : vector<16x128xf32>
    %14 = math.log %13 : vector<16x128xf32>
    %15 = arith.addf %11, %14 : vector<16x128xf32>
    %cst_5 = arith.constant 0.000000e+00 : f32
    %16 = vector.broadcast %cst_5 : f32 to vector<16x128xf32>
    %17 = arith.subf %16, %15 : vector<16x128xf32>
    %18 = math.exp %17 : vector<16x128xf32>
    %19 = arith.mulf %15, %18 : vector<16x128xf32>
    %c0_6 = arith.constant 0 : index
    %c0_7 = arith.constant 0 : index
    %20 = vector.load %arg3[%c0_6, %c0_7] : memref<8x128xf32, #tpu.memory_space<vmem>>, vector<1x128xf32>
    %cst_8 = arith.constant dense<0.000000e+00> : vector<128xf32>
    %21 = vector.multi_reduction <add>, %19, %cst_8 [0] : vector<16x128xf32> to vector<128xf32>
    %22 = vector.shape_cast %21 : vector<128xf32> to vector<1x128xf32>
    %23 = arith.addf %20, %22 : vector<1x128xf32>
    %c0_9 = arith.constant 0 : index
    %c0_10 = arith.constant 0 : index
    %24 = vector.load %arg3[%c0_9, %c0_10] : memref<8x128xf32, #tpu.memory_space<vmem>>, vector<1x128xf32>
    tpu.vector_store %arg3[%c0_9, %c0_10], %23 {strides = array<i32>} : memref<8x128xf32, #tpu.memory_space<vmem>>, vector<1x128xf32>,
    return
  }
  func.func @transform_0(%arg0: i32, %arg1: i32) -> (i32, i32) {
    %c1_i32 = arith.constant 1 : i32
    %0 = arith.muli %arg0, %c1_i32 : i32
    %1 = arith.addi %0, %arg1 : i32
    %c0_i32 = arith.constant 0 : i32
    %c0_i32_0 = arith.constant 0 : i32
    return %1, %c0_i32 : i32, i32
  }
  func.func @transform_1(%arg0: i32, %arg1: i32) -> (i32, i32) {
    %c0_i32 = arith.constant 0 : i32
    %c0_i32_0 = arith.constant 0 : i32
    return %arg0, %c0_i32 : i32, i32
  }
}

</mosaic_0001>

<llo_original>
// kernel: tpu_custom_call.1
$region0: #{tpu_custom_call.1}
  #allocation0 [shape = 'u32[]', space=smem, size = 0x4, offset = 0x4, fixed_abs, tag = 'smem constant byte address 0x4 - core index']
  #allocation1 [shape = 'u32[144,128]{1,0:T(1,128)}', space=vmem, size = 0x12000, scoped, tag = 'internal scratch']
  %s0 = inlined_call_operand.hbm [shape: f32[16,128], index: 0, kind: input, shape index: {}]
  %s1 = inlined_call_operand.hbm [shape: f32[8,128], index: 1, kind: output, shape index: {}]
  %s2 = sld [smem:[#allocation0]]
  $region22: #{tpu_custom_call.1} parent=0
    _
  %s4 = ssub.s32 1, %s2
  %s5 = scalar_select 0, %s4, %s2
  $region1: #{tpu_custom_call.1} parent=0
    #allocation2 [shape = 'u8[8192]{0}', space=vmem, size = 0x2000, scoped, tag = 'input window, operand 0, single buffered']
    #allocation3 [shape = 's32[1]{0}', space=sflag, size = 0x4, scoped, tag = 'scoped memory for tpu_custom_call.1']
    #allocation4 [shape = 's32[1]{0}', space=sflag, size = 0x4, scoped, tag = 'scoped memory for tpu_custom_call.1']
    #allocation5 [shape = 'u8[4096]{0}', space=vmem, size = 0x1000, scoped, tag = 'output window, operand 0, single buffered']
    %6 = vsyncpa [#allocation3], 0
    %7 = vsyncpa [#allocation4], 0
    // Predicated region
    $region2: #{tpu_custom_call.1} parent=1 // pred_check
      _
    $region3: #{tpu_custom_call.1} parent=1 // pred_check_branch
      %9 = sbr.rel (0) target = $region5
    $region4: #{tpu_custom_call.1} parent=1 // pred_region
      %s10 = sadd.s32 0, 0
      %s11 = smul.u32 2, %s10
      %s13 = ssub.s32 256, 256
      %14 = vsyncadd [#allocation3], %s13
      %s15 = smul.addr %s11, 128
      %s16 = scalar_lea.hbm %s0, %s15
      %s17 = sshll.u32 [#allocation2], 4
      %s18 = int_to_ptr.vmem [resolvable:$true] %s17
      %23 = dma.hbm_to_vmem [thread:$0]  %s16, 256, %s18, [#allocation3], 128, 128, 8
    $region5: #{tpu_custom_call.1} parent=1 // pred_fallthru
      _
    // Predicated region
    $region6: #{tpu_custom_call.1} parent=1 // pred_check
      _
    $region7: #{tpu_custom_call.1} parent=1 // pred_check_branch
      %25 = sbr.rel (0) target = $region9
    $region8: #{tpu_custom_call.1} parent=1 // pred_region
      %26 = dma.done [#allocation3], 256
    $region9: #{tpu_custom_call.1} parent=1 // pred_fallthru
      _
    %s27 = sadd.s32 0, 0
    %s28 = smul.u32 2, %s27
    %p29 = scmp.eq.s32.totalorder 0, 0
    // Predicated region
    $region10: #{tpu_custom_call.1} parent=1 // pred_check
      %p30 = pneg %p29
    $region11: #{tpu_custom_call.1} parent=1 // pred_check_branch
      %32 = sbr.rel (%p30) target = $region13
    $region12: #{tpu_custom_call.1} parent=1 // pred_region
      %33 = vst [vmem:[#allocation5] sm:$0xff] 0.0
    $region13: #{tpu_custom_call.1} parent=1 // pred_fallthru
      _
    %v34 = vld [vmem:[#allocation2] sm:$0xff]
    %v35 = vld [vmem:[#allocation2 + $0x8] sm:$0xff]
    %v36 = vand.u32 2147483647, %v34
    %v37 = vand.u32 2147483647, %v35
    %v38 = vsub.f32 0.0, %v36
    %v39 = vsub.f32 0.0, %v37
    %v40 = vmul.f32 %v38, 1.442695
    %v41 = vpow.pop %v40
    %v42 = vmul.f32 %v39, 1.442695
    %v43 = vpow.pop %v42
    %v44 = vsub.f32 0.0, %v34
    %v45 = vsub.f32 0.0, %v35
    %v46 = vmax.f32 %v44, 0.0
    %v47 = vmax.f32 %v45, 0.0
    %v48 = vadd.f32 %v41, 1.0
    %v49 = vadd.f32 %v43, 1.0
    %v50 = vlog2.pop %v48
    %v51 = vmul.f32 %v50, 0.6931472
    %v52 = vlog2.pop %v49
    %v53 = vmul.f32 %v52, 0.6931472
    %v54 = vadd.f32 %v46, %v51
    %v55 = vadd.f32 %v47, %v53
    %v56 = vsub.f32 0.0, %v54
    %v57 = vsub.f32 0.0, %v55
    %v58 = vmul.f32 %v56, 1.442695
    %v59 = vpow.pop %v58
    %v60 = vmul.f32 %v57, 1.442695
    %v61 = vpow.pop %v60
    %v62 = vmul.f32 %v54, %v59
    %v63 = vmul.f32 %v55, %v61
    %v64 = vld [vmem:[#allocation5] sm:$0x1]
    %v65 = vadd.f32 %v62, %v63
    %v66 = vrot.slane %v65, 4
    %v67 = vadd.f32 %v65, %v66
    %v68 = vrot.slane %v67, 2
    %v69 = vadd.f32 %v67, %v68
    %v70 = vrot.slane %v69, 1
    %v71 = vadd.f32 %v69, %v70
    %v72 = vadd.f32 %v64, %v71
    %73 = vst [vmem:[#allocation5] sm:$0x1] %v72
    // Predicated region
    $region14: #{tpu_custom_call.1} parent=1 // pred_check
      _
    $region15: #{tpu_custom_call.1} parent=1 // pred_check_branch
      %75 = sbr.rel (0) target = $region17
    $region16: #{tpu_custom_call.1} parent=1 // pred_region
      %s77 = ssub.s32 128, 128
      %78 = vsyncadd [#allocation4], %s77
      %s80 = sshll.u32 [#allocation5], 4
      %s81 = int_to_ptr.vmem [resolvable:$true] %s80
      %83 = dma.vmem_to_hbm [thread:$0]  %s81, 128, %s1, [#allocation4]
    $region17: #{tpu_custom_call.1} parent=1 // pred_fallthru
      _
    // Predicated region
    $region18: #{tpu_custom_call.1} parent=1 // pred_check
      _
    $region19: #{tpu_custom_call.1} parent=1 // pred_check_branch
      %85 = sbr.rel (0) target = $region21
    $region20: #{tpu_custom_call.1} parent=1 // pred_region
      %86 = dma.done [#allocation4], 128
    $region21: #{tpu_custom_call.1} parent=1 // pred_fallthru
      _
    %87 = vsyncpa [#allocation3], 1
    %88 = vsyncpa [#allocation4], 1

</llo_original>
